<compile_context>
chip_gen: v6e
topology: v6e:2x2x1
jax: 0.10.0
libtpu: 0.0.40
codegen_flags: <defaults>
</compile_context>

<pallas_src>
import functools

import jax
import jax.numpy as jnp
from jax.experimental import pallas as pl
from jax.experimental.pallas import tpu as pltpu


# ---------------------------------------------------------------------------
# Pallas kernel: complex contraction over input channels on real/imag planes.
# ---------------------------------------------------------------------------
def _spectral_mul_kernel(xr_ref, xi_ref, wr_ref, wi_ref, or_ref, oi_ref):
    """One grid step of out[b,o,m] += sum_i x[b,i,m] * w[i,o,m] (complex).

    Block shapes:
      xr/xi: (B, tile_cin, tile_m)
      wr/wi: (tile_cin, tile_cout, tile_m)
      or/oi: (B, tile_cout, tile_m) -- resident across the Cin grid axis
             (innermost, "arbitrary"); accumulated into directly.
    """
    k = pl.program_id(2)

    @pl.when(k == 0)
    def _():
        or_ref[...] = jnp.zeros_like(or_ref)
        oi_ref[...] = jnp.zeros_like(oi_ref)

    xr = xr_ref[...]
    xi = xi_ref[...]
    wr = wr_ref[...]
    wi = wi_ref[...]
    t_cin = xr.shape[1]          # <= 8: bounded static unroll

    part_re = None
    part_im = None
    for i in range(t_cin):
        a = xr[:, i, :][:, None, :]          # (B, 1, tile_m)
        b = xi[:, i, :][:, None, :]
        c = wr[i][None, :, :]                # (1, tile_cout, tile_m)
        d = wi[i][None, :, :]
        # Direct complex MAC: 4 muls (+ adds).  On the VPU a mul costs the
        # same slot as an add, so this beats the 3-mul Karatsuba form.
        t_re = a * c - b * d
        t_im = a * d + b * c
        part_re = t_re if part_re is None else part_re + t_re
        part_im = t_im if part_im is None else part_im + t_im

    or_ref[...] += part_re
    oi_ref[...] += part_im


# ---------------------------------------------------------------------------
# Tiling helpers.
# ---------------------------------------------------------------------------
def _round_up(x, m):
    return ((x + m - 1) // m) * m


def _largest_lane_tile(m_pad, cap):
    """Largest multiple-of-128 divisor of m_pad that is <= cap."""
    start = max(128, (min(cap, m_pad) // 128) * 128)
    for t in range(start, 127, -128):
        if m_pad % t == 0:
            return t
    return 128


def _largest_chan_tile(c_pad, cap):
    """Largest multiple-of-8 divisor of c_pad that is <= cap."""
    start = max(8, (min(cap, c_pad) // 8) * 8)
    for t in range(start, 7, -8):
        if c_pad % t == 0:
            return t
    return 8


def _block_bytes(batch, tile_cin, tile_cout, tile_m):
    """Double-buffered VMEM footprint of the kernel's blocks (f32)."""
    x_blk = batch * tile_cin * tile_m * 4
    w_blk = tile_cin * tile_cout * tile_m * 4
    o_blk = batch * tile_cout * tile_m * 4
    # (re + im) planes, each double-buffered by the Pallas pipeline.
    return 4 * (x_blk + w_blk + o_blk)


def _plan_tiles(batch, cin_p, cout_p, m_pad):
    try:
        vmem_cap = int(pltpu.get_tpu_info().vmem_capacity_bytes)
    except Exception:
        vmem_cap = 64 * 1024 * 1024          # assume smallest (v7x per-core)
    block_budget = min(int(vmem_cap * 0.5), 64 * 1024 * 1024)

    tile_cin = min(cin_p, 8)                           # bounded reduction unroll
    tile_cout = _largest_chan_tile(cout_p, 128)        # fetch x once if possible
    tile_m = _largest_lane_tile(m_pad, 1024)

    while _block_bytes(batch, tile_cin, tile_cout, tile_m) > block_budget:
        if tile_m > 128:
            tile_m = _largest_lane_tile(m_pad, tile_m - 128)
        elif tile_cout > 8:
            tile_cout = _largest_chan_tile(cout_p, tile_cout - 8)
        else:
            break

    # v7x megacore: expose >= 2 blocks on the parallel axes when the mode
    # axis is large enough to split (harmless on 1-TC chips).
    n_par = (cout_p // tile_cout) * (m_pad // tile_m)
    if n_par < 2 and m_pad >= 256:
        tile_m = _largest_lane_tile(m_pad, m_pad // 2)

    blocks = _block_bytes(batch, tile_cin, tile_cout, tile_m)
    vmem_limit = min(int(vmem_cap * 0.75), 2 * blocks + 16 * 1024 * 1024)
    return tile_cin, tile_cout, tile_m, vmem_limit


# ---------------------------------------------------------------------------
# pallas_call wrapper: fused, lane-dense complex channel contraction.
# ---------------------------------------------------------------------------
def _compl_mul2d_fused(x_re, x_im, w_re_p, w_im_p, out_channels):
    """out[b,o,m] = sum_i x[b,i,m] * w[i,o,m] (complex) on (re, im) planes.

    x_re/x_im:     (B, Cin, M)            float32 (unpadded)
    w_re_p/w_im_p: (Cin_p, Cout_p, M_pad) float32 (from prepare_spectral_weights)
    returns:       (B, out_channels, M) float32, (B, out_channels, M) float32
    """
    B, Cin, M = x_re.shape
    cin_p, cout_p, m_pad = w_re_p.shape

    tile_cin, tile_cout, tile_m, vmem_limit = _plan_tiles(B, cin_p, cout_p, m_pad)

    if cin_p != Cin or m_pad != M:
        pad_cfg = ((0, 0), (0, cin_p - Cin), (0, m_pad - M))
        x_re = jnp.pad(x_re, pad_cfg)
        x_im = jnp.pad(x_im, pad_cfg)

    grid = (cout_p // tile_cout, m_pad // tile_m, cin_p // tile_cin)

    x_spec = pl.BlockSpec((B, tile_cin, tile_m), lambda j, m, k: (0, k, m))
    w_spec = pl.BlockSpec((tile_cin, tile_cout, tile_m), lambda j, m, k: (k, j, m))
    o_spec = pl.BlockSpec((B, tile_cout, tile_m), lambda j, m, k: (0, j, m))

    grid_spec = pltpu.PrefetchScalarGridSpec(
        num_scalar_prefetch=0,
        grid=grid,
        in_specs=[x_spec, x_spec, w_spec, w_spec],
        out_specs=(o_spec, o_spec),
    )

    out_re, out_im = pl.pallas_call(
        _spectral_mul_kernel,
        out_shape=(
            jax.ShapeDtypeStruct((B, cout_p, m_pad), jnp.float32),
            jax.ShapeDtypeStruct((B, cout_p, m_pad), jnp.float32),
        ),
        grid_spec=grid_spec,
        compiler_params=pltpu.CompilerParams(
            dimension_semantics=("parallel", "parallel", "arbitrary"),
            vmem_limit_bytes=vmem_limit,
        ),
    )(x_re, x_im, w_re_p, w_im_p)

    return out_re[:, :out_channels, :M], out_im[:, :out_channels, :M]


# ---------------------------------------------------------------------------
# One-time parameter prep (hoisted out of the forward pass).
# ---------------------------------------------------------------------------
def prepare_spectral_weights(weights1, weights2):
    """weights1/weights2: (Cin, Cout, modes1, modes2) complex64.

    Returns real/imag planes of the fused low/high-frequency block, flattened
    to (Cin_p, Cout_p, M_pad) with channel dims rounded up to 8 and the mode
    axis zero-padded to a multiple of 128 (lane-dense).
    """
    cin, cout, m1, m2 = weights1.shape
    w_blk = jnp.concatenate([weights1, weights2], axis=2)    # (Cin, Cout, 2*m1, m2)
    n_modes = 2 * m1 * m2
    w_re = jnp.real(w_blk).astype(jnp.float32).reshape(cin, cout, n_modes)
    w_im = jnp.imag(w_blk).astype(jnp.float32).reshape(cin, cout, n_modes)

    cin_p = _round_up(cin, 8)
    cout_p = _round_up(cout, 8)
    m_pad = _round_up(n_modes, 128)
    pad_cfg = ((0, cin_p - cin), (0, cout_p - cout), (0, m_pad - n_modes))
    return jnp.pad(w_re, pad_cfg), jnp.pad(w_im, pad_cfg)


# ---------------------------------------------------------------------------
# Forward pass equivalent to PyTorch SpectralConv2d.forward.
# ---------------------------------------------------------------------------
def spectral_conv2d(x, w_re_p, w_im_p, modes1, modes2, out_channels):
    """x: (B, Cin, H, W) float32; w_*_p from prepare_spectral_weights."""
    B, Cin, H, W = x.shape
    Wf = W // 2 + 1

    # TODO(synk): FFT / inverse FFT have no Pallas TPU primitive; computed in plain JAX.
    x_ft = jnp.fft.rfft2(x)                                  # (B, Cin, H, Wf) c64

    # Fuse low- and high-frequency blocks into one lane-dense slab.
    x_blk = jnp.concatenate(
        [x_ft[:, :, :modes1, :modes2], x_ft[:, :, -modes1:, :modes2]], axis=2)
    n_modes = 2 * modes1 * modes2
    x_re = jnp.real(x_blk).astype(jnp.float32).reshape(B, Cin, n_modes)
    x_im = jnp.imag(x_blk).astype(jnp.float32).reshape(B, Cin, n_modes)

    o_re, o_im = _compl_mul2d_fused(x_re, x_im, w_re_p, w_im_p, out_channels)
    o_re = o_re.reshape(B, out_channels, 2 * modes1, modes2)
    o_im = o_im.reshape(B, out_channels, 2 * modes1, modes2)
    o_c = (o_re + 1j * o_im).astype(jnp.complex64)

    out_ft = jnp.zeros((B, out_channels, H, Wf), jnp.complex64)
    out_ft = out_ft.at[:, :, :modes1, :modes2].set(o_c[:, :, :modes1])
    out_ft = out_ft.at[:, :, -modes1:, :modes2].set(o_c[:, :, modes1:])

    x_out = jnp.fft.irfft2(out_ft, s=(H, W))                 # (B, Cout, H, W)
    return x_out.astype(jnp.float32)


# ---------------------------------------------------------------------------
# Pure-JAX reference (mirrors the PyTorch code) for correctness check.
# ---------------------------------------------------------------------------
def _reference_spectral_conv2d(x, weights1, weights2, modes1, modes2):
    B, Cin, H, W = x.shape
    Cout = weights1.shape[1]
    x_ft = jnp.fft.rfft2(x)
    out_ft = jnp.zeros((B, Cout, H, W // 2 + 1), jnp.complex64)
    out_ft = out_ft.at[:, :, :modes1, :modes2].set(
        jnp.einsum("bixy,ioxy->boxy", x_ft[:, :, :modes1, :modes2], weights1)
    )
    out_ft = out_ft.at[:, :, -modes1:, :modes2].set(
        jnp.einsum("bixy,ioxy->boxy", x_ft[:, :, -modes1:, :modes2], weights2)
    )
    return jnp.fft.irfft2(out_ft, s=(H, W))


if __name__ == "__main__":
    # Small shapes consistent with the module.
    B, Cin, Cout = 2, 4, 4
    H = W = 16
    modes1, modes2 = 4, 4

    key = jax.random.PRNGKey(0)
    kx, kw1r, kw1i, kw2r, kw2i = jax.random.split(key, 5)

    x = jax.random.normal(kx, (B, Cin, H, W), dtype=jnp.float32)

    # Deterministic init matching torch.rand(..., dtype=cfloat) semantics:
    # real and imag parts ~ U[0, 1), scaled by 1/(Cin*Cout).
    scale = 1.0 / (Cin * Cout)
    w_shape = (Cin, Cout, modes1, modes2)
    weights1 = scale * (
        jax.random.uniform(kw1r, w_shape, dtype=jnp.float32)
        + 1j * jax.random.uniform(kw1i, w_shape, dtype=jnp.float32)
    ).astype(jnp.complex64)
    weights2 = scale * (
        jax.random.uniform(kw2r, w_shape, dtype=jnp.float32)
        + 1j * jax.random.uniform(kw2i, w_shape, dtype=jnp.float32)
    ).astype(jnp.complex64)

    # Weight relayout (concat, re/im split, flatten, pad) is done ONCE here,
    # not on every forward call.
    w_re_p, w_im_p = prepare_spectral_weights(weights1, weights2)
    w_re_p, w_im_p = jax.block_until_ready((w_re_p, w_im_p))

    fwd = jax.jit(functools.partial(
        spectral_conv2d, modes1=modes1, modes2=modes2, out_channels=Cout))

    out = jax.block_until_ready(fwd(x, w_re_p, w_im_p))
    ref = jax.block_until_ready(
        _reference_spectral_conv2d(x, weights1, weights2, modes1, modes2)
    )

    assert out.shape == (B, Cout, H, W), out.shape
    assert jnp.allclose(out, ref, atol=1e-4, rtol=1e-4), (
        float(jnp.max(jnp.abs(out - ref)))
    )
    print("KERNEL_OK")
</pallas_src>

<mosaic_0001>
module attributes {stable_mosaic.version = 11 : i64} {
  func.func @_spectral_mul_kernel(%arg0: i32, %arg1: i32, %arg2: i32, %arg3: memref<2x8x128xf32, #tpu.memory_space<vmem>>, %arg4: memref<2x8x128xf32, #tpu.memory_space<vmem>>, %arg5: memref<8x8x128xf32, #tpu.memory_space<vmem>>, %arg6: memref<8x8x128xf32, #tpu.memory_space<vmem>>, %arg7: memref<2x8x128xf32, #tpu.memory_space<vmem>>, %arg8: memref<2x8x128xf32, #tpu.memory_space<vmem>>) attributes {dimension_semantics = [#tpu.dimension_semantics<parallel>, #tpu.dimension_semantics<parallel>, #tpu.dimension_semantics<arbitrary>], iteration_bounds = array<i64: 1, 1, 1>, scalar_prefetch = 0 : i64, scratch_operands = 0 : i64, tpu.core_type = #tpu.core_type<tc>, window_params = [{transform_indices = @transform_0, window_bounds = array<i64: 2, 8, 128>}, {transform_indices = @transform_1, window_bounds = array<i64: 2, 8, 128>}, {transform_indices = @transform_2, window_bounds = array<i64: 8, 8, 128>}, {transform_indices = @transform_3, window_bounds = array<i64: 8, 8, 128>}, {transform_indices = @transform_4, window_bounds = array<i64: 2, 8, 128>}, {transform_indices = @transform_5, window_bounds = array<i64: 2, 8, 128>}]} {
    %c0_i32 = arith.constant 0 : i32
    %0 = arith.cmpi eq, %arg2, %c0_i32 : i32
    %1 = arith.extui %0 : i1 to i32
    %c0_i32_0 = arith.constant 0 : i32
    %2 = arith.cmpi ne, %1, %c0_i32_0 : i32
    scf.if %2 {
      %cst = arith.constant 0.000000e+00 : f32
      %235 = vector.broadcast %cst : f32 to vector<2x8x128xf32>
      %c0_24 = arith.constant 0 : index
      %c0_25 = arith.constant 0 : index
      %c0_26 = arith.constant 0 : index
      %236 = vector.load %arg7[%c0_24, %c0_25, %c0_26] : memref<2x8x128xf32, #tpu.memory_space<vmem>>, vector<2x8x128xf32>
      tpu.vector_store %arg7[%c0_24, %c0_25, %c0_26], %235 {strides = array<i32>} : memref<2x8x128xf32, #tpu.memory_space<vmem>>, vector<2x8x128xf32>,
      %cst_27 = arith.constant 0.000000e+00 : f32
      %237 = vector.broadcast %cst_27 : f32 to vector<2x8x128xf32>
      %c0_28 = arith.constant 0 : index
      %c0_29 = arith.constant 0 : index
      %c0_30 = arith.constant 0 : index
      %238 = vector.load %arg8[%c0_28, %c0_29, %c0_30] : memref<2x8x128xf32, #tpu.memory_space<vmem>>, vector<2x8x128xf32>
      tpu.vector_store %arg8[%c0_28, %c0_29, %c0_30], %237 {strides = array<i32>} : memref<2x8x128xf32, #tpu.memory_space<vmem>>, vector<2x8x128xf32>,
    } else {
    }
    %c0 = arith.constant 0 : index
    %c0_1 = arith.constant 0 : index
    %c0_2 = arith.constant 0 : index
    %3 = vector.load %arg3[%c0, %c0_1, %c0_2] : memref<2x8x128xf32, #tpu.memory_space<vmem>>, vector<2x8x128xf32>
    %c0_3 = arith.constant 0 : index
    %c0_4 = arith.constant 0 : index
    %c0_5 = arith.constant 0 : index
    %4 = vector.load %arg4[%c0_3, %c0_4, %c0_5] : memref<2x8x128xf32, #tpu.memory_space<vmem>>, vector<2x8x128xf32>
    %c0_6 = arith.constant 0 : index
    %c0_7 = arith.constant 0 : index
    %c0_8 = arith.constant 0 : index
    %5 = vector.load %arg5[%c0_6, %c0_7, %c0_8] : memref<8x8x128xf32, #tpu.memory_space<vmem>>, vector<8x8x128xf32>
    %c0_9 = arith.constant 0 : index
    %c0_10 = arith.constant 0 : index
    %c0_11 = arith.constant 0 : index
    %6 = vector.load %arg6[%c0_9, %c0_10, %c0_11] : memref<8x8x128xf32, #tpu.memory_space<vmem>>, vector<8x8x128xf32>
    %7 = vector.extract_strided_slice %3 {offsets = [0, 0, 0], sizes = [2, 1, 128], strides = [1, 1, 1]} : vector<2x8x128xf32> to vector<2x1x128xf32>
    %8 = vector.shape_cast %7 : vector<2x1x128xf32> to vector<2x128xf32>
    %9 = vector.shape_cast %8 : vector<2x128xf32> to vector<2x1x128xf32>
    %10 = vector.extract_strided_slice %4 {offsets = [0, 0, 0], sizes = [2, 1, 128], strides = [1, 1, 1]} : vector<2x8x128xf32> to vector<2x1x128xf32>
    %11 = vector.shape_cast %10 : vector<2x1x128xf32> to vector<2x128xf32>
    %12 = vector.shape_cast %11 : vector<2x128xf32> to vector<2x1x128xf32>
    %13 = vector.extract_strided_slice %5 {offsets = [0, 0, 0], sizes = [1, 8, 128], strides = [1, 1, 1]} : vector<8x8x128xf32> to vector<1x8x128xf32>
    %14 = vector.shape_cast %13 : vector<1x8x128xf32> to vector<8x128xf32>
    %15 = vector.shape_cast %14 : vector<8x128xf32> to vector<1x8x128xf32>
    %16 = vector.extract_strided_slice %6 {offsets = [0, 0, 0], sizes = [1, 8, 128], strides = [1, 1, 1]} : vector<8x8x128xf32> to vector<1x8x128xf32>
    %17 = vector.shape_cast %16 : vector<1x8x128xf32> to vector<8x128xf32>
    %18 = vector.shape_cast %17 : vector<8x128xf32> to vector<1x8x128xf32>
    %19 = vector.broadcast %9 : vector<2x1x128xf32> to vector<2x8x128xf32>
    %20 = vector.broadcast %15 : vector<1x8x128xf32> to vector<2x8x128xf32>
    %21 = arith.mulf %19, %20 : vector<2x8x128xf32>
    %22 = vector.broadcast %12 : vector<2x1x128xf32> to vector<2x8x128xf32>
    %23 = vector.broadcast %18 : vector<1x8x128xf32> to vector<2x8x128xf32>
    %24 = arith.mulf %22, %23 : vector<2x8x128xf32>
    %25 = arith.subf %21, %24 : vector<2x8x128xf32>
    %26 = vector.broadcast %9 : vector<2x1x128xf32> to vector<2x8x128xf32>
    %27 = vector.broadcast %18 : vector<1x8x128xf32> to vector<2x8x128xf32>
    %28 = arith.mulf %26, %27 : vector<2x8x128xf32>
    %29 = vector.broadcast %12 : vector<2x1x128xf32> to vector<2x8x128xf32>
    %30 = vector.broadcast %15 : vector<1x8x128xf32> to vector<2x8x128xf32>
    %31 = arith.mulf %29, %30 : vector<2x8x128xf32>
    %32 = arith.addf %28, %31 : vector<2x8x128xf32>
    %33 = vector.extract_strided_slice %3 {offsets = [0, 1, 0], sizes = [2, 1, 128], strides = [1, 1, 1]} : vector<2x8x128xf32> to vector<2x1x128xf32>
    %34 = vector.shape_cast %33 : vector<2x1x128xf32> to vector<2x128xf32>
    %35 = vector.shape_cast %34 : vector<2x128xf32> to vector<2x1x128xf32>
    %36 = vector.extract_strided_slice %4 {offsets = [0, 1, 0], sizes = [2, 1, 128], strides = [1, 1, 1]} : vector<2x8x128xf32> to vector<2x1x128xf32>
    %37 = vector.shape_cast %36 : vector<2x1x128xf32> to vector<2x128xf32>
    %38 = vector.shape_cast %37 : vector<2x128xf32> to vector<2x1x128xf32>
    %39 = vector.extract_strided_slice %5 {offsets = [1, 0, 0], sizes = [1, 8, 128], strides = [1, 1, 1]} : vector<8x8x128xf32> to vector<1x8x128xf32>
    %40 = vector.shape_cast %39 : vector<1x8x128xf32> to vector<8x128xf32>
    %41 = vector.shape_cast %40 : vector<8x128xf32> to vector<1x8x128xf32>
    %42 = vector.extract_strided_slice %6 {offsets = [1, 0, 0], sizes = [1, 8, 128], strides = [1, 1, 1]} : vector<8x8x128xf32> to vector<1x8x128xf32>
    %43 = vector.shape_cast %42 : vector<1x8x128xf32> to vector<8x128xf32>
    %44 = vector.shape_cast %43 : vector<8x128xf32> to vector<1x8x128xf32>
    %45 = vector.broadcast %35 : vector<2x1x128xf32> to vector<2x8x128xf32>
    %46 = vector.broadcast %41 : vector<1x8x128xf32> to vector<2x8x128xf32>
    %47 = arith.mulf %45, %46 : vector<2x8x128xf32>
    %48 = vector.broadcast %38 : vector<2x1x128xf32> to vector<2x8x128xf32>
    %49 = vector.broadcast %44 : vector<1x8x128xf32> to vector<2x8x128xf32>
    %50 = arith.mulf %48, %49 : vector<2x8x128xf32>
    %51 = arith.subf %47, %50 : vector<2x8x128xf32>
    %52 = vector.broadcast %35 : vector<2x1x128xf32> to vector<2x8x128xf32>
    %53 = vector.broadcast %44 : vector<1x8x128xf32> to vector<2x8x128xf32>
    %54 = arith.mulf %52, %53 : vector<2x8x128xf32>
    %55 = vector.broadcast %38 : vector<2x1x128xf32> to vector<2x8x128xf32>
    %56 = vector.broadcast %41 : vector<1x8x128xf32> to vector<2x8x128xf32>
    %57 = arith.mulf %55, %56 : vector<2x8x128xf32>
    %58 = arith.addf %54, %57 : vector<2x8x128xf32>
    %59 = arith.addf %25, %51 : vector<2x8x128xf32>
    %60 = arith.addf %32, %58 : vector<2x8x128xf32>
    %61 = vector.extract_strided_slice %3 {offsets = [0, 2, 0], sizes = [2, 1, 128], strides = [1, 1, 1]} : vector<2x8x128xf32> to vector<2x1x128xf32>
    %62 = vector.shape_cast %61 : vector<2x1x128xf32> to vector<2x128xf32>
    %63 = vector.shape_cast %62 : vector<2x128xf32> to vector<2x1x128xf32>
    %64 = vector.extract_strided_slice %4 {offsets = [0, 2, 0], sizes = [2, 1, 128], strides = [1, 1, 1]} : vector<2x8x128xf32> to vector<2x1x128xf32>
    %65 = vector.shape_cast %64 : vector<2x1x128xf32> to vector<2x128xf32>
    %66 = vector.shape_cast %65 : vector<2x128xf32> to vector<2x1x128xf32>
    %67 = vector.extract_strided_slice %5 {offsets = [2, 0, 0], sizes = [1, 8, 128], strides = [1, 1, 1]} : vector<8x8x128xf32> to vector<1x8x128xf32>
    %68 = vector.shape_cast %67 : vector<1x8x128xf32> to vector<8x128xf32>
    %69 = vector.shape_cast %68 : vector<8x128xf32> to vector<1x8x128xf32>
    %70 = vector.extract_strided_slice %6 {offsets = [2, 0, 0], sizes = [1, 8, 128], strides = [1, 1, 1]} : vector<8x8x128xf32> to vector<1x8x128xf32>
    %71 = vector.shape_cast %70 : vector<1x8x128xf32> to vector<8x128xf32>
    %72 = vector.shape_cast %71 : vector<8x128xf32> to vector<1x8x128xf32>
    %73 = vector.broadcast %63 : vector<2x1x128xf32> to vector<2x8x128xf32>
    %74 = vector.broadcast %69 : vector<1x8x128xf32> to vector<2x8x128xf32>
    %75 = arith.mulf %73, %74 : vector<2x8x128xf32>
    %76 = vector.broadcast %66 : vector<2x1x128xf32> to vector<2x8x128xf32>
    %77 = vector.broadcast %72 : vector<1x8x128xf32> to vector<2x8x128xf32>
    %78 = arith.mulf %76, %77 : vector<2x8x128xf32>
    %79 = arith.subf %75, %78 : vector<2x8x128xf32>
    %80 = vector.broadcast %63 : vector<2x1x128xf32> to vector<2x8x128xf32>
    %81 = vector.broadcast %72 : vector<1x8x128xf32> to vector<2x8x128xf32>
    %82 = arith.mulf %80, %81 : vector<2x8x128xf32>
    %83 = vector.broadcast %66 : vector<2x1x128xf32> to vector<2x8x128xf32>
    %84 = vector.broadcast %69 : vector<1x8x128xf32> to vector<2x8x128xf32>
    %85 = arith.mulf %83, %84 : vector<2x8x128xf32>
    %86 = arith.addf %82, %85 : vector<2x8x128xf32>
    %87 = arith.addf %59, %79 : vector<2x8x128xf32>
    %88 = arith.addf %60, %86 : vector<2x8x128xf32>
    %89 = vector.extract_strided_slice %3 {offsets = [0, 3, 0], sizes = [2, 1, 128], strides = [1, 1, 1]} : vector<2x8x128xf32> to vector<2x1x128xf32>
    %90 = vector.shape_cast %89 : vector<2x1x128xf32> to vector<2x128xf32>
    %91 = vector.shape_cast %90 : vector<2x128xf32> to vector<2x1x128xf32>
    %92 = vector.extract_strided_slice %4 {offsets = [0, 3, 0], sizes = [2, 1, 128], strides = [1, 1, 1]} : vector<2x8x128xf32> to vector<2x1x128xf32>
    %93 = vector.shape_cast %92 : vector<2x1x128xf32> to vector<2x128xf32>
    %94 = vector.shape_cast %93 : vector<2x128xf32> to vector<2x1x128xf32>
    %95 = vector.extract_strided_slice %5 {offsets = [3, 0, 0], sizes = [1, 8, 128], strides = [1, 1, 1]} : vector<8x8x128xf32> to vector<1x8x128xf32>
    %96 = vector.shape_cast %95 : vector<1x8x128xf32> to vector<8x128xf32>
    %97 = vector.shape_cast %96 : vector<8x128xf32> to vector<1x8x128xf32>
    %98 = vector.extract_strided_slice %6 {offsets = [3, 0, 0], sizes = [1, 8, 128], strides = [1, 1, 1]} : vector<8x8x128xf32> to vector<1x8x128xf32>
    %99 = vector.shape_cast %98 : vector<1x8x128xf32> to vector<8x128xf32>
    %100 = vector.shape_cast %99 : vector<8x128xf32> to vector<1x8x128xf32>
    %101 = vector.broadcast %91 : vector<2x1x128xf32> to vector<2x8x128xf32>
    %102 = vector.broadcast %97 : vector<1x8x128xf32> to vector<2x8x128xf32>
    %103 = arith.mulf %101, %102 : vector<2x8x128xf32>
    %104 = vector.broadcast %94 : vector<2x1x128xf32> to vector<2x8x128xf32>
    %105 = vector.broadcast %100 : vector<1x8x128xf32> to vector<2x8x128xf32>
    %106 = arith.mulf %104, %105 : vector<2x8x128xf32>
    %107 = arith.subf %103, %106 : vector<2x8x128xf32>
    %108 = vector.broadcast %91 : vector<2x1x128xf32> to vector<2x8x128xf32>
    %109 = vector.broadcast %100 : vector<1x8x128xf32> to vector<2x8x128xf32>
    %110 = arith.mulf %108, %109 : vector<2x8x128xf32>
    %111 = vector.broadcast %94 : vector<2x1x128xf32> to vector<2x8x128xf32>
    %112 = vector.broadcast %97 : vector<1x8x128xf32> to vector<2x8x128xf32>
    %113 = arith.mulf %111, %112 : vector<2x8x128xf32>
    %114 = arith.addf %110, %113 : vector<2x8x128xf32>
    %115 = arith.addf %87, %107 : vector<2x8x128xf32>
    %116 = arith.addf %88, %114 : vector<2x8x128xf32>
    %117 = vector.extract_strided_slice %3 {offsets = [0, 4, 0], sizes = [2, 1, 128], strides = [1, 1, 1]} : vector<2x8x128xf32> to vector<2x1x128xf32>
    %118 = vector.shape_cast %117 : vector<2x1x128xf32> to vector<2x128xf32>
    %119 = vector.shape_cast %118 : vector<2x128xf32> to vector<2x1x128xf32>
    %120 = vector.extract_strided_slice %4 {offsets = [0, 4, 0], sizes = [2, 1, 128], strides = [1, 1, 1]} : vector<2x8x128xf32> to vector<2x1x128xf32>
    %121 = vector.shape_cast %120 : vector<2x1x128xf32> to vector<2x128xf32>
    %122 = vector.shape_cast %121 : vector<2x128xf32> to vector<2x1x128xf32>
    %123 = vector.extract_strided_slice %5 {offsets = [4, 0, 0], sizes = [1, 8, 128], strides = [1, 1, 1]} : vector<8x8x128xf32> to vector<1x8x128xf32>
    %124 = vector.shape_cast %123 : vector<1x8x128xf32> to vector<8x128xf32>
    %125 = vector.shape_cast %124 : vector<8x128xf32> to vector<1x8x128xf32>
    %126 = vector.extract_strided_slice %6 {offsets = [4, 0, 0], sizes = [1, 8, 128], strides = [1, 1, 1]} : vector<8x8x128xf32> to vector<1x8x128xf32>
    %127 = vector.shape_cast %126 : vector<1x8x128xf32> to vector<8x128xf32>
    %128 = vector.shape_cast %127 : vector<8x128xf32> to vector<1x8x128xf32>
    %129 = vector.broadcast %119 : vector<2x1x128xf32> to vector<2x8x128xf32>
    %130 = vector.broadcast %125 : vector<1x8x128xf32> to vector<2x8x128xf32>
    %131 = arith.mulf %129, %130 : vector<2x8x128xf32>
    %132 = vector.broadcast %122 : vector<2x1x128xf32> to vector<2x8x128xf32>
    %133 = vector.broadcast %128 : vector<1x8x128xf32> to vector<2x8x128xf32>
    %134 = arith.mulf %132, %133 : vector<2x8x128xf32>
    %135 = arith.subf %131, %134 : vector<2x8x128xf32>
    %136 = vector.broadcast %119 : vector<2x1x128xf32> to vector<2x8x128xf32>
    %137 = vector.broadcast %128 : vector<1x8x128xf32> to vector<2x8x128xf32>
    %138 = arith.mulf %136, %137 : vector<2x8x128xf32>
    %139 = vector.broadcast %122 : vector<2x1x128xf32> to vector<2x8x128xf32>
    %140 = vector.broadcast %125 : vector<1x8x128xf32> to vector<2x8x128xf32>
    %141 = arith.mulf %139, %140 : vector<2x8x128xf32>
    %142 = arith.addf %138, %141 : vector<2x8x128xf32>
    %143 = arith.addf %115, %135 : vector<2x8x128xf32>
    %144 = arith.addf %116, %142 : vector<2x8x128xf32>
    %145 = vector.extract_strided_slice %3 {offsets = [0, 5, 0], sizes = [2, 1, 128], strides = [1, 1, 1]} : vector<2x8x128xf32> to vector<2x1x128xf32>
    %146 = vector.shape_cast %145 : vector<2x1x128xf32> to vector<2x128xf32>
    %147 = vector.shape_cast %146 : vector<2x128xf32> to vector<2x1x128xf32>
    %148 = vector.extract_strided_slice %4 {offsets = [0, 5, 0], sizes = [2, 1, 128], strides = [1, 1, 1]} : vector<2x8x128xf32> to vector<2x1x128xf32>
    %149 = vector.shape_cast %148 : vector<2x1x128xf32> to vector<2x128xf32>
    %150 = vector.shape_cast %149 : vector<2x128xf32> to vector<2x1x128xf32>
    %151 = vector.extract_strided_slice %5 {offsets = [5, 0, 0], sizes = [1, 8, 128], strides = [1, 1, 1]} : vector<8x8x128xf32> to vector<1x8x128xf32>
    %152 = vector.shape_cast %151 : vector<1x8x128xf32> to vector<8x128xf32>
    %153 = vector.shape_cast %152 : vector<8x128xf32> to vector<1x8x128xf32>
    %154 = vector.extract_strided_slice %6 {offsets = [5, 0, 0], sizes = [1, 8, 128], strides = [1, 1, 1]} : vector<8x8x128xf32> to vector<1x8x128xf32>
    %155 = vector.shape_cast %154 : vector<1x8x128xf32> to vector<8x128xf32>
    %156 = vector.shape_cast %155 : vector<8x128xf32> to vector<1x8x128xf32>
    %157 = vector.broadcast %147 : vector<2x1x128xf32> to vector<2x8x128xf32>
    %158 = vector.broadcast %153 : vector<1x8x128xf32> to vector<2x8x128xf32>
    %159 = arith.mulf %157, %158 : vector<2x8x128xf32>
    %160 = vector.broadcast %150 : vector<2x1x128xf32> to vector<2x8x128xf32>
    %161 = vector.broadcast %156 : vector<1x8x128xf32> to vector<2x8x128xf32>
    %162 = arith.mulf %160, %161 : vector<2x8x128xf32>
    %163 = arith.subf %159, %162 : vector<2x8x128xf32>
    %164 = vector.broadcast %147 : vector<2x1x128xf32> to vector<2x8x128xf32>
    %165 = vector.broadcast %156 : vector<1x8x128xf32> to vector<2x8x128xf32>
    %166 = arith.mulf %164, %165 : vector<2x8x128xf32>
    %167 = vector.broadcast %150 : vector<2x1x128xf32> to vector<2x8x128xf32>
    %168 = vector.broadcast %153 : vector<1x8x128xf32> to vector<2x8x128xf32>
    %169 = arith.mulf %167, %168 : vector<2x8x128xf32>
    %170 = arith.addf %166, %169 : vector<2x8x128xf32>
    %171 = arith.addf %143, %163 : vector<2x8x128xf32>
    %172 = arith.addf %144, %170 : vector<2x8x128xf32>
    %173 = vector.extract_strided_slice %3 {offsets = [0, 6, 0], sizes = [2, 1, 128], strides = [1, 1, 1]} : vector<2x8x128xf32> to vector<2x1x128xf32>
    %174 = vector.shape_cast %173 : vector<2x1x128xf32> to vector<2x128xf32>
    %175 = vector.shape_cast %174 : vector<2x128xf32> to vector<2x1x128xf32>
    %176 = vector.extract_strided_slice %4 {offsets = [0, 6, 0], sizes = [2, 1, 128], strides = [1, 1, 1]} : vector<2x8x128xf32> to vector<2x1x128xf32>
    %177 = vector.shape_cast %176 : vector<2x1x128xf32> to vector<2x128xf32>
    %178 = vector.shape_cast %177 : vector<2x128xf32> to vector<2x1x128xf32>
    %179 = vector.extract_strided_slice %5 {offsets = [6, 0, 0], sizes = [1, 8, 128], strides = [1, 1, 1]} : vector<8x8x128xf32> to vector<1x8x128xf32>
    %180 = vector.shape_cast %179 : vector<1x8x128xf32> to vector<8x128xf32>
    %181 = vector.shape_cast %180 : vector<8x128xf32> to vector<1x8x128xf32>
    %182 = vector.extract_strided_slice %6 {offsets = [6, 0, 0], sizes = [1, 8, 128], strides = [1, 1, 1]} : vector<8x8x128xf32> to vector<1x8x128xf32>
    %183 = vector.shape_cast %182 : vector<1x8x128xf32> to vector<8x128xf32>
    %184 = vector.shape_cast %183 : vector<8x128xf32> to vector<1x8x128xf32>
    %185 = vector.broadcast %175 : vector<2x1x128xf32> to vector<2x8x128xf32>
    %186 = vector.broadcast %181 : vector<1x8x128xf32> to vector<2x8x128xf32>
    %187 = arith.mulf %185, %186 : vector<2x8x128xf32>
    %188 = vector.broadcast %178 : vector<2x1x128xf32> to vector<2x8x128xf32>
    %189 = vector.broadcast %184 : vector<1x8x128xf32> to vector<2x8x128xf32>
    %190 = arith.mulf %188, %189 : vector<2x8x128xf32>
    %191 = arith.subf %187, %190 : vector<2x8x128xf32>
    %192 = vector.broadcast %175 : vector<2x1x128xf32> to vector<2x8x128xf32>
    %193 = vector.broadcast %184 : vector<1x8x128xf32> to vector<2x8x128xf32>
    %194 = arith.mulf %192, %193 : vector<2x8x128xf32>
    %195 = vector.broadcast %178 : vector<2x1x128xf32> to vector<2x8x128xf32>
    %196 = vector.broadcast %181 : vector<1x8x128xf32> to vector<2x8x128xf32>
    %197 = arith.mulf %195, %196 : vector<2x8x128xf32>
    %198 = arith.addf %194, %197 : vector<2x8x128xf32>
    %199 = arith.addf %171, %191 : vector<2x8x128xf32>
    %200 = arith.addf %172, %198 : vector<2x8x128xf32>
    %201 = vector.extract_strided_slice %3 {offsets = [0, 7, 0], sizes = [2, 1, 128], strides = [1, 1, 1]} : vector<2x8x128xf32> to vector<2x1x128xf32>
    %202 = vector.shape_cast %201 : vector<2x1x128xf32> to vector<2x128xf32>
    %203 = vector.shape_cast %202 : vector<2x128xf32> to vector<2x1x128xf32>
    %204 = vector.extract_strided_slice %4 {offsets = [0, 7, 0], sizes = [2, 1, 128], strides = [1, 1, 1]} : vector<2x8x128xf32> to vector<2x1x128xf32>
    %205 = vector.shape_cast %204 : vector<2x1x128xf32> to vector<2x128xf32>
    %206 = vector.shape_cast %205 : vector<2x128xf32> to vector<2x1x128xf32>
    %207 = vector.extract_strided_slice %5 {offsets = [7, 0, 0], sizes = [1, 8, 128], strides = [1, 1, 1]} : vector<8x8x128xf32> to vector<1x8x128xf32>
    %208 = vector.shape_cast %207 : vector<1x8x128xf32> to vector<8x128xf32>
    %209 = vector.shape_cast %208 : vector<8x128xf32> to vector<1x8x128xf32>
    %210 = vector.extract_strided_slice %6 {offsets = [7, 0, 0], sizes = [1, 8, 128], strides = [1, 1, 1]} : vector<8x8x128xf32> to vector<1x8x128xf32>
    %211 = vector.shape_cast %210 : vector<1x8x128xf32> to vector<8x128xf32>
    %212 = vector.shape_cast %211 : vector<8x128xf32> to vector<1x8x128xf32>
    %213 = vector.broadcast %203 : vector<2x1x128xf32> to vector<2x8x128xf32>
    %214 = vector.broadcast %209 : vector<1x8x128xf32> to vector<2x8x128xf32>
    %215 = arith.mulf %213, %214 : vector<2x8x128xf32>
    %216 = vector.broadcast %206 : vector<2x1x128xf32> to vector<2x8x128xf32>
    %217 = vector.broadcast %212 : vector<1x8x128xf32> to vector<2x8x128xf32>
    %218 = arith.mulf %216, %217 : vector<2x8x128xf32>
    %219 = arith.subf %215, %218 : vector<2x8x128xf32>
    %220 = vector.broadcast %203 : vector<2x1x128xf32> to vector<2x8x128xf32>
    %221 = vector.broadcast %212 : vector<1x8x128xf32> to vector<2x8x128xf32>
    %222 = arith.mulf %220, %221 : vector<2x8x128xf32>
    %223 = vector.broadcast %206 : vector<2x1x128xf32> to vector<2x8x128xf32>
    %224 = vector.broadcast %209 : vector<1x8x128xf32> to vector<2x8x128xf32>
    %225 = arith.mulf %223, %224 : vector<2x8x128xf32>
    %226 = arith.addf %222, %225 : vector<2x8x128xf32>
    %227 = arith.addf %199, %219 : vector<2x8x128xf32>
    %228 = arith.addf %200, %226 : vector<2x8x128xf32>
    %c0_12 = arith.constant 0 : index
    %c0_13 = arith.constant 0 : index
    %c0_14 = arith.constant 0 : index
    %229 = vector.load %arg7[%c0_12, %c0_13, %c0_14] : memref<2x8x128xf32, #tpu.memory_space<vmem>>, vector<2x8x128xf32>
    %230 = arith.addf %229, %227 : vector<2x8x128xf32>
    %c0_15 = arith.constant 0 : index
    %c0_16 = arith.constant 0 : index
    %c0_17 = arith.constant 0 : index
    %231 = vector.load %arg7[%c0_15, %c0_16, %c0_17] : memref<2x8x128xf32, #tpu.memory_space<vmem>>, vector<2x8x128xf32>
    tpu.vector_store %arg7[%c0_15, %c0_16, %c0_17], %230 {strides = array<i32>} : memref<2x8x128xf32, #tpu.memory_space<vmem>>, vector<2x8x128xf32>,
    %c0_18 = arith.constant 0 : index
    %c0_19 = arith.constant 0 : index
    %c0_20 = arith.constant 0 : index
    %232 = vector.load %arg8[%c0_18, %c0_19, %c0_20] : memref<2x8x128xf32, #tpu.memory_space<vmem>>, vector<2x8x128xf32>
    %233 = arith.addf %232, %228 : vector<2x8x128xf32>
    %c0_21 = arith.constant 0 : index
    %c0_22 = arith.constant 0 : index
    %c0_23 = arith.constant 0 : index
    %234 = vector.load %arg8[%c0_21, %c0_22, %c0_23] : memref<2x8x128xf32, #tpu.memory_space<vmem>>, vector<2x8x128xf32>
    tpu.vector_store %arg8[%c0_21, %c0_22, %c0_23], %233 {strides = array<i32>} : memref<2x8x128xf32, #tpu.memory_space<vmem>>, vector<2x8x128xf32>,
    return
  }
  func.func @transform_0(%arg0: i32, %arg1: i32, %arg2: i32) -> (i32, i32, i32) {
    %c0_i32 = arith.constant 0 : i32
    %c0_i32_0 = arith.constant 0 : i32
    return %c0_i32, %arg2, %arg1 : i32, i32, i32
  }
  func.func @transform_1(%arg0: i32, %arg1: i32, %arg2: i32) -> (i32, i32, i32) {
    %c0_i32 = arith.constant 0 : i32
    %c0_i32_0 = arith.constant 0 : i32
    return %c0_i32, %arg2, %arg1 : i32, i32, i32
  }
  func.func @transform_2(%arg0: i32, %arg1: i32, %arg2: i32) -> (i32, i32, i32) {
    %c0_i32 = arith.constant 0 : i32
    return %arg2, %arg0, %arg1 : i32, i32, i32
  }
  func.func @transform_3(%arg0: i32, %arg1: i32, %arg2: i32) -> (i32, i32, i32) {
    %c0_i32 = arith.constant 0 : i32
    return %arg2, %arg0, %arg1 : i32, i32, i32
  }
  func.func @transform_4(%arg0: i32, %arg1: i32, %arg2: i32) -> (i32, i32, i32) {
    %c0_i32 = arith.constant 0 : i32
    %c0_i32_0 = arith.constant 0 : i32
    return %c0_i32, %arg0, %arg1 : i32, i32, i32
  }
  func.func @transform_5(%arg0: i32, %arg1: i32, %arg2: i32) -> (i32, i32, i32) {
    %c0_i32 = arith.constant 0 : i32
    %c0_i32_0 = arith.constant 0 : i32
    return %c0_i32, %arg0, %arg1 : i32, i32, i32
  }
}

</mosaic_0001>

<llo_original>
// kernel: reverse.1
$region0: #{reverse.1}
  %s0 = inlined_call_operand.vmem [shape: f32[2,4,16,7], index: 0, kind: input, shape index: {}]
  %s1 = inlined_call_operand.vmem [shape: f32[2,4,16,7], index: 1, kind: output, shape index: {}]
  $region1: #{reverse.1} parent=0
    #allocation0 [shape = 'u8[65536]{0}', space=vmem, size = 0x10000, scoped, tag = 'operand span for operand 0']
    #allocation1 [shape = 'u8[32768]{0}', space=vmem, size = 0x8000, scoped, tag = 'operand span for operand 1']
    %s2 = scalar_lea.vmem [#allocation0], 8
    // Predicated region
    $region2: #{reverse.1} parent=1 // pred_check
      _
    $region3: #{reverse.1} parent=1 // pred_check_branch
      %4 = sbr.rel (0) target = $region5
    $region4: #{reverse.1} parent=1 // pred_region
      // Predicated region
      $region6: #{reverse.1} parent=4 // pred_check
        _
      $region7: #{reverse.1} parent=4 // pred_check_branch
        %6 = sbr.rel (0) target = $region9
      $region8: #{reverse.1} parent=4 // pred_region
        // Predicated region
        $region21: #{reverse.1} parent=8 // pred_check
          _
        $region22: #{reverse.1} parent=8 // pred_check_branch
          %36 = sbr.rel (0) target = $region24
        $region23: #{reverse.1} parent=8 // pred_region
          loop: start=0, step=1, limit=1
          $region25: #{reverse.1} parent=23 // loop_pre_header
            _
          $region26: #{reverse.1} parent=23 // loop_header
            %s38 = sphi 0, %s42
            %p39 = scmp.ge.s32.totalorder %s38, 1
            %s43 = sphi %s0, %s0
            %s44 = sphi %s2, %s2
          $region27: #{reverse.1} parent=23 // loop_header_branch
            %41 = sbr.rel (%p39) target = $region31
          $region28: #{reverse.1} parent=23 // loop_body
            %v45 = vld [vmem:[%s43] sm:$0xff]
            %46 = vst [vmem:[%s44] sm:$0xff] %v45
            %v47 = vld [vmem:[%s43 + $0x8] sm:$0xff]
            %48 = vst [vmem:[%s44 + $0x10] sm:$0xff] %v47
            %v49 = vld [vmem:[%s43 + $0x10] sm:$0xff]
            %50 = vst [vmem:[%s44 + $0x20] sm:$0xff] %v49
            %v51 = vld [vmem:[%s43 + $0x18] sm:$0xff]
            %52 = vst [vmem:[%s44 + $0x30] sm:$0xff] %v51
            %v53 = vld [vmem:[%s43 + $0x20] sm:$0xff]
            %54 = vst [vmem:[%s44 + $0x40] sm:$0xff] %v53
            %v55 = vld [vmem:[%s43 + $0x28] sm:$0xff]
            %56 = vst [vmem:[%s44 + $0x50] sm:$0xff] %v55
            %v57 = vld [vmem:[%s43 + $0x30] sm:$0xff]
            %58 = vst [vmem:[%s44 + $0x60] sm:$0xff] %v57
            %v59 = vld [vmem:[%s43 + $0x38] sm:$0xff]
            %60 = vst [vmem:[%s44 + $0x70] sm:$0xff] %v59
          $region29: #{reverse.1} parent=23 // loop_footer
            %s42 = sadd.s32 1, %s38
          $region30: #{reverse.1} parent=23 // loop_footer_branch
            %37 = sbr.rel target = $region26
          $region31: #{reverse.1} parent=23 // loop_exit
            _
        $region24: #{reverse.1} parent=8 // pred_fallthru
          _
        // Predicated region
        $region32: #{reverse.1} parent=8 // pred_check
          _
        $region33: #{reverse.1} parent=8 // pred_check_branch
          %62 = sbr.rel target = $region35
        $region34: #{reverse.1} parent=8 // pred_region
          _
        $region35: #{reverse.1} parent=8 // pred_fallthru
          _
      $region9: #{reverse.1} parent=4 // pred_fallthru
        _
      // Predicated region
      $region10: #{reverse.1} parent=4 // pred_check
        _
      $region11: #{reverse.1} parent=4 // pred_check_branch
        %8 = sbr.rel target = $region13
      $region12: #{reverse.1} parent=4 // pred_region
        %s10 = ssub.s32 256, 1
        loop: start=0, step=1, limit=1
        $region14: #{reverse.1} parent=12 // loop_pre_header
          _
        $region15: #{reverse.1} parent=12 // loop_header
          %s12 = sphi 0, %s16
          %p13 = scmp.ge.s32.totalorder %s12, 1
          %s17 = sphi %s0, %s0
          %s18 = sphi %s2, %s2
        $region16: #{reverse.1} parent=12 // loop_header_branch
          %15 = sbr.rel (%p13) target = $region20
        $region17: #{reverse.1} parent=12 // loop_body
          %v19 = vld [vmem:[%s17] sm:%s10]
          %20 = vst [vmem:[%s18] sm:%s10] %v19
          %v21 = vld [vmem:[%s17 + $0x8] sm:%s10]
          %22 = vst [vmem:[%s18 + $0x10] sm:%s10] %v21
          %v23 = vld [vmem:[%s17 + $0x10] sm:%s10]
          %24 = vst [vmem:[%s18 + $0x20] sm:%s10] %v23
          %v25 = vld [vmem:[%s17 + $0x18] sm:%s10]
          %26 = vst [vmem:[%s18 + $0x30] sm:%s10] %v25
          %v27 = vld [vmem:[%s17 + $0x20] sm:%s10]
          %28 = vst [vmem:[%s18 + $0x40] sm:%s10] %v27
          %v29 = vld [vmem:[%s17 + $0x28] sm:%s10]
          %30 = vst [vmem:[%s18 + $0x50] sm:%s10] %v29
          %v31 = vld [vmem:[%s17 + $0x30] sm:%s10]
          %32 = vst [vmem:[%s18 + $0x60] sm:%s10] %v31
          %v33 = vld [vmem:[%s17 + $0x38] sm:%s10]
          %34 = vst [vmem:[%s18 + $0x70] sm:%s10] %v33
        $region18: #{reverse.1} parent=12 // loop_footer
          %s16 = sadd.s32 1, %s12
        $region19: #{reverse.1} parent=12 // loop_footer_branch
          %11 = sbr.rel target = $region15
        $region20: #{reverse.1} parent=12 // loop_exit
          _
      $region13: #{reverse.1} parent=4 // pred_fallthru
        _
    $region5: #{reverse.1} parent=1 // pred_fallthru
      _
    %63 = vnop
    %s64 = scalar_lea.vmem [#allocation0], 7
    %v65 = vld [vmem:[%s64] ss:$-1 sm:$0xff]
    %v66 = vrot.slane %v65, 1
    %67 = vst [vmem:[#allocation1] sm:$0xff] %v66
    %s68 = scalar_lea.vmem [#allocation0], 8
    %s69 = scalar_lea.vmem %s68, 7 [#allocation0]
    %v70 = vld [vmem:[%s69] ss:$-1 sm:$0xff]
    %v71 = vrot.slane %v70, 1
    %v72 = vlaneseq
    %v73 = vshrl.u32 %v72, 7
    %vm74 = vcmp.lt.s32.totalorder %v73, 7
    %75 = vst.msk [vmem:[#allocation1] sm:$0xff] %vm74, %v71
    %s76 = scalar_lea.vmem [#allocation1], 8
    %s77 = scalar_lea.vmem [#allocation0], 16
    %s78 = scalar_lea.vmem %s77, 7 [#allocation0]
    %v79 = vld [vmem:[%s78] ss:$-1 sm:$0xff]
    %v80 = vrot.slane %v79, 1
    %81 = vst [vmem:[%s76] sm:$0xff] %v80
    %s82 = scalar_lea.vmem %s77, 8 [#allocation0]
    %s83 = scalar_lea.vmem %s82, 7 [#allocation0]
    %v84 = vld [vmem:[%s83] ss:$-1 sm:$0xff]
    %v85 = vrot.slane %v84, 1
    %v86 = vlaneseq
    %v87 = vshrl.u32 %v86, 7
    %vm88 = vcmp.lt.s32.totalorder %v87, 7
    %89 = vst.msk [vmem:[%s76] sm:$0xff] %vm88, %v85
    %s90 = scalar_lea.vmem [#allocation1], 16
    %s91 = scalar_lea.vmem [#allocation0], 32
    %s92 = scalar_lea.vmem %s91, 7 [#allocation0]
    %v93 = vld [vmem:[%s92] ss:$-1 sm:$0xff]
    %v94 = vrot.slane %v93, 1
    %95 = vst [vmem:[%s90] sm:$0xff] %v94
    %s96 = scalar_lea.vmem %s91, 8 [#allocation0]
    %s97 = scalar_lea.vmem %s96, 7 [#allocation0]
    %v98 = vld [vmem:[%s97] ss:$-1 sm:$0xff]
    %v99 = vrot.slane %v98, 1
    %v100 = vlaneseq
    %v101 = vshrl.u32 %v100, 7
    %vm102 = vcmp.lt.s32.totalorder %v101, 7
    %103 = vst.msk [vmem:[%s90] sm:$0xff] %vm102, %v99
    %s104 = scalar_lea.vmem [#allocation1], 24
    %s105 = scalar_lea.vmem [#allocation0], 48
    %s106 = scalar_lea.vmem %s105, 7 [#allocation0]
    %v107 = vld [vmem:[%s106] ss:$-1 sm:$0xff]
    %v108 = vrot.slane %v107, 1
    %109 = vst [vmem:[%s104] sm:$0xff] %v108
    %s110 = scalar_lea.vmem %s105, 8 [#allocation0]
    %s111 = scalar_lea.vmem %s110, 7 [#allocation0]
    %v112 = vld [vmem:[%s111] ss:$-1 sm:$0xff]
    %v113 = vrot.slane %v112, 1
    %v114 = vlaneseq
    %v115 = vshrl.u32 %v114, 7
    %vm116 = vcmp.lt.s32.totalorder %v115, 7
    %117 = vst.msk [vmem:[%s104] sm:$0xff] %vm116, %v113
    %s118 = scalar_lea.vmem [#allocation1], 32
    %s119 = scalar_lea.vmem [#allocation0], 64
    %s120 = scalar_lea.vmem %s119, 7 [#allocation0]
    %v121 = vld [vmem:[%s120] ss:$-1 sm:$0xff]
    %v122 = vrot.slane %v121, 1
    %123 = vst [vmem:[%s118] sm:$0xff] %v122
    %s124 = scalar_lea.vmem %s119, 8 [#allocation0]
    %s125 = scalar_lea.vmem %s124, 7 [#allocation0]
    %v126 = vld [vmem:[%s125] ss:$-1 sm:$0xff]
    %v127 = vrot.slane %v126, 1
    %v128 = vlaneseq
    %v129 = vshrl.u32 %v128, 7
    %vm130 = vcmp.lt.s32.totalorder %v129, 7
    %131 = vst.msk [vmem:[%s118] sm:$0xff] %vm130, %v127
    %s132 = scalar_lea.vmem [#allocation1], 40
    %s133 = scalar_lea.vmem [#allocation0], 80
    %s134 = scalar_lea.vmem %s133, 7 [#allocation0]
    %v135 = vld [vmem:[%s134] ss:$-1 sm:$0xff]
    %v136 = vrot.slane %v135, 1
    %137 = vst [vmem:[%s132] sm:$0xff] %v136
    %s138 = scalar_lea.vmem %s133, 8 [#allocation0]
    %s139 = scalar_lea.vmem %s138, 7 [#allocation0]
    %v140 = vld [vmem:[%s139] ss:$-1 sm:$0xff]
    %v141 = vrot.slane %v140, 1
    %v142 = vlaneseq
    %v143 = vshrl.u32 %v142, 7
    %vm144 = vcmp.lt.s32.totalorder %v143, 7
    %145 = vst.msk [vmem:[%s132] sm:$0xff] %vm144, %v141
    %s146 = scalar_lea.vmem [#allocation1], 48
    %s147 = scalar_lea.vmem [#allocation0], 96
    %s148 = scalar_lea.vmem %s147, 7 [#allocation0]
    %v149 = vld [vmem:[%s148] ss:$-1 sm:$0xff]
    %v150 = vrot.slane %v149, 1
    %151 = vst [vmem:[%s146] sm:$0xff] %v150
    %s152 = scalar_lea.vmem %s147, 8 [#allocation0]
    %s153 = scalar_lea.vmem %s152, 7 [#allocation0]
    %v154 = vld [vmem:[%s153] ss:$-1 sm:$0xff]
    %v155 = vrot.slane %v154, 1
    %v156 = vlaneseq
    %v157 = vshrl.u32 %v156, 7
    %vm158 = vcmp.lt.s32.totalorder %v157, 7
    %159 = vst.msk [vmem:[%s146] sm:$0xff] %vm158, %v155
    %s160 = scalar_lea.vmem [#allocation1], 56
    %s161 = scalar_lea.vmem [#allocation0], 112
    %s162 = scalar_lea.vmem %s161, 7 [#allocation0]
    %v163 = vld [vmem:[%s162] ss:$-1 sm:$0xff]
    %v164 = vrot.slane %v163, 1
    %165 = vst [vmem:[%s160] sm:$0xff] %v164
    %s166 = scalar_lea.vmem %s161, 8 [#allocation0]
    %s167 = scalar_lea.vmem %s166, 7 [#allocation0]
    %v168 = vld [vmem:[%s167] ss:$-1 sm:$0xff]
    %v169 = vrot.slane %v168, 1
    %v170 = vlaneseq
    %v171 = vshrl.u32 %v170, 7
    %vm172 = vcmp.lt.s32.totalorder %v171, 7
    %173 = vst.msk [vmem:[%s160] sm:$0xff] %vm172, %v169
    // Predicated region
    $region36: #{reverse.1} parent=1 // pred_check
      _
    $region37: #{reverse.1} parent=1 // pred_check_branch
      %175 = sbr.rel (0) target = $region39
    $region38: #{reverse.1} parent=1 // pred_region
      // Predicated region
      $region40: #{reverse.1} parent=38 // pred_check
        _
      $region41: #{reverse.1} parent=38 // pred_check_branch
        %177 = sbr.rel (0) target = $region43
      $region42: #{reverse.1} parent=38 // pred_region
        // Predicated region
        $region55: #{reverse.1} parent=42 // pred_check
          _
        $region56: #{reverse.1} parent=42 // pred_check_branch
          %207 = sbr.rel (0) target = $region58
        $region57: #{reverse.1} parent=42 // pred_region
          loop: start=0, step=1, limit=1
          $region59: #{reverse.1} parent=57 // loop_pre_header
            _
          $region60: #{reverse.1} parent=57 // loop_header
            %s209 = sphi 0, %s213
            %p210 = scmp.ge.s32.totalorder %s209, 1
            %s214 = sphi [#allocation1], [#allocation1]
            %s215 = sphi %s1, %s1
          $region61: #{reverse.1} parent=57 // loop_header_branch
            %212 = sbr.rel (%p210) target = $region65
          $region62: #{reverse.1} parent=57 // loop_body
            %v216 = vld [vmem:[%s214] sm:$0xff]
            %217 = vst [vmem:[%s215] sm:$0xff] %v216
            %v218 = vld [vmem:[%s214 + $0x8] sm:$0xff]
            %219 = vst [vmem:[%s215 + $0x8] sm:$0xff] %v218
            %v220 = vld [vmem:[%s214 + $0x10] sm:$0xff]
            %221 = vst [vmem:[%s215 + $0x10] sm:$0xff] %v220
            %v222 = vld [vmem:[%s214 + $0x18] sm:$0xff]
            %223 = vst [vmem:[%s215 + $0x18] sm:$0xff] %v222
            %v224 = vld [vmem:[%s214 + $0x20] sm:$0xff]
            %225 = vst [vmem:[%s215 + $0x20] sm:$0xff] %v224
            %v226 = vld [vmem:[%s214 + $0x28] sm:$0xff]
            %227 = vst [vmem:[%s215 + $0x28] sm:$0xff] %v226
            %v228 = vld [vmem:[%s214 + $0x30] sm:$0xff]
            %229 = vst [vmem:[%s215 + $0x30] sm:$0xff] %v228
            %v230 = vld [vmem:[%s214 + $0x38] sm:$0xff]
            %231 = vst [vmem:[%s215 + $0x38] sm:$0xff] %v230
          $region63: #{reverse.1} parent=57 // loop_footer
            %s213 = sadd.s32 1, %s209
          $region64: #{reverse.1} parent=57 // loop_footer_branch
            %208 = sbr.rel target = $region60
          $region65: #{reverse.1} parent=57 // loop_exit
            _
        $region58: #{reverse.1} parent=42 // pred_fallthru
          _
        // Predicated region
        $region66: #{reverse.1} parent=42 // pred_check
          _
        $region67: #{reverse.1} parent=42 // pred_check_branch
          %233 = sbr.rel target = $region69
        $region68: #{reverse.1} parent=42 // pred_region
          _
        $region69: #{reverse.1} parent=42 // pred_fallthru
          _
      $region43: #{reverse.1} parent=38 // pred_fallthru
        _
      // Predicated region
      $region44: #{reverse.1} parent=38 // pred_check
        _
      $region45: #{reverse.1} parent=38 // pred_check_branch
        %179 = sbr.rel target = $region47
      $region46: #{reverse.1} parent=38 // pred_region
        %s181 = ssub.s32 256, 1
        loop: start=0, step=1, limit=1
        $region48: #{reverse.1} parent=46 // loop_pre_header
          _
        $region49: #{reverse.1} parent=46 // loop_header
          %s183 = sphi 0, %s187
          %p184 = scmp.ge.s32.totalorder %s183, 1
          %s188 = sphi [#allocation1], [#allocation1]
          %s189 = sphi %s1, %s1
        $region50: #{reverse.1} parent=46 // loop_header_branch
          %186 = sbr.rel (%p184) target = $region54
        $region51: #{reverse.1} parent=46 // loop_body
          %v190 = vld [vmem:[%s188] sm:%s181]
          %191 = vst [vmem:[%s189] sm:%s181] %v190
          %v192 = vld [vmem:[%s188 + $0x8] sm:%s181]
          %193 = vst [vmem:[%s189 + $0x8] sm:%s181] %v192
          %v194 = vld [vmem:[%s188 + $0x10] sm:%s181]
          %195 = vst [vmem:[%s189 + $0x10] sm:%s181] %v194
          %v196 = vld [vmem:[%s188 + $0x18] sm:%s181]
          %197 = vst [vmem:[%s189 + $0x18] sm:%s181] %v196
          %v198 = vld [vmem:[%s188 + $0x20] sm:%s181]
          %199 = vst [vmem:[%s189 + $0x20] sm:%s181] %v198
          %v200 = vld [vmem:[%s188 + $0x28] sm:%s181]
          %201 = vst [vmem:[%s189 + $0x28] sm:%s181] %v200
          %v202 = vld [vmem:[%s188 + $0x30] sm:%s181]
          %203 = vst [vmem:[%s189 + $0x30] sm:%s181] %v202
          %v204 = vld [vmem:[%s188 + $0x38] sm:%s181]
          %205 = vst [vmem:[%s189 + $0x38] sm:%s181] %v204
        $region52: #{reverse.1} parent=46 // loop_footer
          %s187 = sadd.s32 1, %s183
        $region53: #{reverse.1} parent=46 // loop_footer_branch
          %182 = sbr.rel target = $region49
        $region54: #{reverse.1} parent=46 // loop_exit
          _
      $region47: #{reverse.1} parent=38 // pred_fallthru
        _
    $region39: #{reverse.1} parent=1 // pred_fallthru
      _
    %234 = vnop

// kernel: spectral_conv2d.1
$region0: #{spectral_conv2d.1}
  #allocation0 [shape = 'u32[]', space=smem, size = 0x4, offset = 0x4, fixed_abs, tag = 'smem constant byte address 0x4 - core index']
  #allocation1 [shape = 'u32[144,128]{1,0:T(1,128)}', space=vmem, size = 0x12000, scoped, tag = 'internal scratch']
  %s0 = inlined_call_operand.vmem [shape: f32[2,8,128], index: 0, kind: input, shape index: {}]
  %s1 = inlined_call_operand.vmem [shape: f32[2,8,128], index: 1, kind: input, shape index: {}]
  %s2 = inlined_call_operand.vmem [shape: f32[8,8,128], index: 2, kind: input, shape index: {}]
  %s3 = inlined_call_operand.vmem [shape: f32[8,8,128], index: 3, kind: input, shape index: {}]
  %s4 = inlined_call_operand.vmem [shape: f32[2,8,128], index: 4, kind: output, shape index: {0}]
  %s5 = inlined_call_operand.vmem [shape: f32[2,8,128], index: 5, kind: output, shape index: {1}]
  %6 = xla_tuple %s4, %s5
  %s7 = sld [smem:[#allocation0]]
  $region38: #{spectral_conv2d.1} parent=0
    _
  %s9 = ssub.s32 1, %s7
  %s10 = scalar_select 0, %s9, %s7
  // Predicated region
  $region2: #{spectral_conv2d.1} parent=0 // pred_check
    _
  $region3: #{spectral_conv2d.1} parent=0 // pred_check_branch
    %12 = sbr.rel (0) target = $region5
  $region4: #{spectral_conv2d.1} parent=0 // pred_region
    _
  $region5: #{spectral_conv2d.1} parent=0 // pred_fallthru
    _
  // Predicated region
  $region6: #{spectral_conv2d.1} parent=0 // pred_check
    _
  $region7: #{spectral_conv2d.1} parent=0 // pred_check_branch
    %14 = sbr.rel (0) target = $region9
  $region8: #{spectral_conv2d.1} parent=0 // pred_region
    _
  $region9: #{spectral_conv2d.1} parent=0 // pred_fallthru
    _
  // Predicated region
  $region10: #{spectral_conv2d.1} parent=0 // pred_check
    _
  $region11: #{spectral_conv2d.1} parent=0 // pred_check_branch
    %16 = sbr.rel (0) target = $region13
  $region12: #{spectral_conv2d.1} parent=0 // pred_region
    _
  $region13: #{spectral_conv2d.1} parent=0 // pred_fallthru
    _
  // Predicated region
  $region14: #{spectral_conv2d.1} parent=0 // pred_check
    _
  $region15: #{spectral_conv2d.1} parent=0 // pred_check_branch
    %18 = sbr.rel (0) target = $region17
  $region16: #{spectral_conv2d.1} parent=0 // pred_region
    _
  $region17: #{spectral_conv2d.1} parent=0 // pred_fallthru
    _
  %p19 = scmp.eq.s32.totalorder 0, 0
  // Predicated region
  $region18: #{spectral_conv2d.1} parent=0 // pred_check
    %p20 = pneg %p19
  $region19: #{spectral_conv2d.1} parent=0 // pred_check_branch
    %22 = sbr.rel (%p20) target = $region21
  $region20: #{spectral_conv2d.1} parent=0 // pred_region
    %23 = vst [vmem:[%s4] sm:$0xff] 0.0
    %24 = vst [vmem:[%s4 + $0x8] sm:$0xff] 0.0
    %25 = vst [vmem:[%s5] sm:$0xff] 0.0
    %26 = vst [vmem:[%s5 + $0x8] sm:$0xff] 0.0
  $region21: #{spectral_conv2d.1} parent=0 // pred_fallthru
    _
  %v27 = vld [vmem:[%s0] sm:$0xff]
  %v28 = vld [vmem:[%s0 + $0x8] sm:$0xff]
  %v29 = vld [vmem:[%s1] sm:$0xff]
  %v30 = vld [vmem:[%s1 + $0x8] sm:$0xff]
  %v31 = vld [vmem:[%s2] sm:$0xff]
  %v32 = vld [vmem:[%s2 + $0x8] sm:$0xff]
  %v33 = vld [vmem:[%s2 + $0x10] sm:$0xff]
  %v34 = vld [vmem:[%s2 + $0x18] sm:$0xff]
  %v35 = vld [vmem:[%s2 + $0x20] sm:$0xff]
  %v36 = vld [vmem:[%s2 + $0x28] sm:$0xff]
  %v37 = vld [vmem:[%s2 + $0x30] sm:$0xff]
  %v38 = vld [vmem:[%s2 + $0x38] sm:$0xff]
  %v39 = vld [vmem:[%s3] sm:$0xff]
  %v40 = vld [vmem:[%s3 + $0x8] sm:$0xff]
  %v41 = vld [vmem:[%s3 + $0x10] sm:$0xff]
  %v42 = vld [vmem:[%s3 + $0x18] sm:$0xff]
  %v43 = vld [vmem:[%s3 + $0x20] sm:$0xff]
  %v44 = vld [vmem:[%s3 + $0x28] sm:$0xff]
  %v45 = vld [vmem:[%s3 + $0x30] sm:$0xff]
  %v46 = vld [vmem:[%s3 + $0x38] sm:$0xff]
  %v47 = vlaneseq
  %v48 = vshrl.u32 %v47, 7
  %v49 = vsub.s32 0, %v48
  %v50 = vrot.slane %v27, %v49
  %v51 = vlaneseq
  %v52 = vshrl.u32 %v51, 7
  %v53 = vsub.s32 0, %v52
  %v54 = vrot.slane %v28, %v53
  %v55 = vmul.f32 %v50, %v31
  %v56 = vmul.f32 %v54, %v31
  %v57 = vlaneseq
  %v58 = vshrl.u32 %v57, 7
  %v59 = vsub.s32 0, %v58
  %v60 = vrot.slane %v29, %v59
  %v61 = vlaneseq
  %v62 = vshrl.u32 %v61, 7
  %v63 = vsub.s32 0, %v62
  %v64 = vrot.slane %v30, %v63
  %v65 = vmul.f32 %v60, %v39
  %v66 = vmul.f32 %v64, %v39
  %v67 = vsub.f32 %v55, %v65
  %v68 = vsub.f32 %v56, %v66
  %v69 = vmul.f32 %v50, %v39
  %v70 = vmul.f32 %v54, %v39
  %v71 = vmul.f32 %v60, %v31
  %v72 = vmul.f32 %v64, %v31
  %v73 = vadd.f32 %v69, %v71
  %v74 = vadd.f32 %v70, %v72
  %v75 = vlaneseq
  %v76 = vshrl.u32 %v75, 7
  %v77 = vsub.s32 1, %v76
  %v78 = vrot.slane %v27, %v77
  %v79 = vlaneseq
  %v80 = vshrl.u32 %v79, 7
  %v81 = vsub.s32 1, %v80
  %v82 = vrot.slane %v28, %v81
  %v83 = vmul.f32 %v78, %v32
  %v84 = vmul.f32 %v82, %v32
  %v85 = vlaneseq
  %v86 = vshrl.u32 %v85, 7
  %v87 = vsub.s32 1, %v86
  %v88 = vrot.slane %v29, %v87
  %v89 = vlaneseq
  %v90 = vshrl.u32 %v89, 7
  %v91 = vsub.s32 1, %v90
  %v92 = vrot.slane %v30, %v91
  %v93 = vmul.f32 %v88, %v40
  %v94 = vmul.f32 %v92, %v40
  %v95 = vsub.f32 %v83, %v93
  %v96 = vsub.f32 %v84, %v94
  %v97 = vmul.f32 %v78, %v40
  %v98 = vmul.f32 %v82, %v40
  %v99 = vmul.f32 %v88, %v32
  %v100 = vmul.f32 %v92, %v32
  %v101 = vadd.f32 %v97, %v99
  %v102 = vadd.f32 %v98, %v100
  %v103 = vadd.f32 %v67, %v95
  %v104 = vadd.f32 %v68, %v96
  %v105 = vadd.f32 %v73, %v101
  %v106 = vadd.f32 %v74, %v102
  %v107 = vlaneseq
  %v108 = vshrl.u32 %v107, 7
  %v109 = vsub.s32 2, %v108
  %v110 = vrot.slane %v27, %v109
  %v111 = vlaneseq
  %v112 = vshrl.u32 %v111, 7
  %v113 = vsub.s32 2, %v112
  %v114 = vrot.slane %v28, %v113
  %v115 = vmul.f32 %v110, %v33
  %v116 = vmul.f32 %v114, %v33
  %v117 = vlaneseq
  %v118 = vshrl.u32 %v117, 7
  %v119 = vsub.s32 2, %v118
  %v120 = vrot.slane %v29, %v119
  %v121 = vlaneseq
  %v122 = vshrl.u32 %v121, 7
  %v123 = vsub.s32 2, %v122
  %v124 = vrot.slane %v30, %v123
  %v125 = vmul.f32 %v120, %v41
  %v126 = vmul.f32 %v124, %v41
  %v127 = vsub.f32 %v115, %v125
  %v128 = vsub.f32 %v116, %v126
  %v129 = vmul.f32 %v110, %v41
  %v130 = vmul.f32 %v114, %v41
  %v131 = vmul.f32 %v120, %v33
  %v132 = vmul.f32 %v124, %v33
  %v133 = vadd.f32 %v129, %v131
  %v134 = vadd.f32 %v130, %v132
  %v135 = vadd.f32 %v103, %v127
  %v136 = vadd.f32 %v104, %v128
  %v137 = vadd.f32 %v105, %v133
  %v138 = vadd.f32 %v106, %v134
  %v139 = vlaneseq
  %v140 = vshrl.u32 %v139, 7
  %v141 = vsub.s32 3, %v140
  %v142 = vrot.slane %v27, %v141
  %v143 = vlaneseq
  %v144 = vshrl.u32 %v143, 7
  %v145 = vsub.s32 3, %v144
  %v146 = vrot.slane %v28, %v145
  %v147 = vmul.f32 %v142, %v34
  %v148 = vmul.f32 %v146, %v34
  %v149 = vlaneseq
  %v150 = vshrl.u32 %v149, 7
  %v151 = vsub.s32 3, %v150
  %v152 = vrot.slane %v29, %v151
  %v153 = vlaneseq
  %v154 = vshrl.u32 %v153, 7
  %v155 = vsub.s32 3, %v154
  %v156 = vrot.slane %v30, %v155
  %v157 = vmul.f32 %v152, %v42
  %v158 = vmul.f32 %v156, %v42
  %v159 = vsub.f32 %v147, %v157
  %v160 = vsub.f32 %v148, %v158
  %v161 = vmul.f32 %v142, %v42
  %v162 = vmul.f32 %v146, %v42
  %v163 = vmul.f32 %v152, %v34
  %v164 = vmul.f32 %v156, %v34
  %v165 = vadd.f32 %v161, %v163
  %v166 = vadd.f32 %v162, %v164
  %v167 = vadd.f32 %v135, %v159
  %v168 = vadd.f32 %v136, %v160
  %v169 = vadd.f32 %v137, %v165
  %v170 = vadd.f32 %v138, %v166
  %v171 = vlaneseq
  %v172 = vshrl.u32 %v171, 7
  %v173 = vsub.s32 4, %v172
  %v174 = vrot.slane %v27, %v173
  %v175 = vlaneseq
  %v176 = vshrl.u32 %v175, 7
  %v177 = vsub.s32 4, %v176
  %v178 = vrot.slane %v28, %v177
  %v179 = vmul.f32 %v174, %v35
  %v180 = vmul.f32 %v178, %v35
  %v181 = vlaneseq
  %v182 = vshrl.u32 %v181, 7
  %v183 = vsub.s32 4, %v182
  %v184 = vrot.slane %v29, %v183
  %v185 = vlaneseq
  %v186 = vshrl.u32 %v185, 7
  %v187 = vsub.s32 4, %v186
  %v188 = vrot.slane %v30, %v187
  %v189 = vmul.f32 %v184, %v43
  %v190 = vmul.f32 %v188, %v43
  %v191 = vsub.f32 %v179, %v189
  %v192 = vsub.f32 %v180, %v190
  %v193 = vmul.f32 %v174, %v43
  %v194 = vmul.f32 %v178, %v43
  %v195 = vmul.f32 %v184, %v35
  %v196 = vmul.f32 %v188, %v35
  %v197 = vadd.f32 %v193, %v195
  %v198 = vadd.f32 %v194, %v196
  %v199 = vadd.f32 %v167, %v191
  %v200 = vadd.f32 %v168, %v192
  %v201 = vadd.f32 %v169, %v197
  %v202 = vadd.f32 %v170, %v198
  %v203 = vlaneseq
  %v204 = vshrl.u32 %v203, 7
  %v205 = vsub.s32 5, %v204
  %v206 = vrot.slane %v27, %v205
  %v207 = vlaneseq
  %v208 = vshrl.u32 %v207, 7
  %v209 = vsub.s32 5, %v208
  %v210 = vrot.slane %v28, %v209
  %v211 = vmul.f32 %v206, %v36
  %v212 = vmul.f32 %v210, %v36
  %v213 = vlaneseq
  %v214 = vshrl.u32 %v213, 7
  %v215 = vsub.s32 5, %v214
  %v216 = vrot.slane %v29, %v215
  %v217 = vlaneseq
  %v218 = vshrl.u32 %v217, 7
  %v219 = vsub.s32 5, %v218
  %v220 = vrot.slane %v30, %v219
  %v221 = vmul.f32 %v216, %v44
  %v222 = vmul.f32 %v220, %v44
  %v223 = vsub.f32 %v211, %v221
  %v224 = vsub.f32 %v212, %v222
  %v225 = vmul.f32 %v206, %v44
  %v226 = vmul.f32 %v210, %v44
  %v227 = vmul.f32 %v216, %v36
  %v228 = vmul.f32 %v220, %v36
  %v229 = vadd.f32 %v225, %v227
  %v230 = vadd.f32 %v226, %v228
  %v231 = vadd.f32 %v199, %v223
  %v232 = vadd.f32 %v200, %v224
  %v233 = vadd.f32 %v201, %v229
  %v234 = vadd.f32 %v202, %v230
  %v235 = vlaneseq
  %v236 = vshrl.u32 %v235, 7
  %v237 = vsub.s32 6, %v236
  %v238 = vrot.slane %v27, %v237
  %v239 = vlaneseq
  %v240 = vshrl.u32 %v239, 7
  %v241 = vsub.s32 6, %v240
  %v242 = vrot.slane %v28, %v241
  %v243 = vmul.f32 %v238, %v37
  %v244 = vmul.f32 %v242, %v37
  %v245 = vlaneseq
  %v246 = vshrl.u32 %v245, 7
  %v247 = vsub.s32 6, %v246
  %v248 = vrot.slane %v29, %v247
  %v249 = vlaneseq
  %v250 = vshrl.u32 %v249, 7
  %v251 = vsub.s32 6, %v250
  %v252 = vrot.slane %v30, %v251
  %v253 = vmul.f32 %v248, %v45
  %v254 = vmul.f32 %v252, %v45
  %v255 = vsub.f32 %v243, %v253
  %v256 = vsub.f32 %v244, %v254
  %v257 = vmul.f32 %v238, %v45
  %v258 = vmul.f32 %v242, %v45
  %v259 = vmul.f32 %v248, %v37
  %v260 = vmul.f32 %v252, %v37
  %v261 = vadd.f32 %v257, %v259
  %v262 = vadd.f32 %v258, %v260
  %v263 = vadd.f32 %v231, %v255
  %v264 = vadd.f32 %v232, %v256
  %v265 = vadd.f32 %v233, %v261
  %v266 = vadd.f32 %v234, %v262
  %v267 = vlaneseq
  %v268 = vshrl.u32 %v267, 7
  %v269 = vsub.s32 7, %v268
  %v270 = vrot.slane %v27, %v269
  %v271 = vlaneseq
  %v272 = vshrl.u32 %v271, 7
  %v273 = vsub.s32 7, %v272
  %v274 = vrot.slane %v28, %v273
  %v275 = vmul.f32 %v270, %v38
  %v276 = vmul.f32 %v274, %v38
  %v277 = vlaneseq
  %v278 = vshrl.u32 %v277, 7
  %v279 = vsub.s32 7, %v278
  %v280 = vrot.slane %v29, %v279
  %v281 = vlaneseq
  %v282 = vshrl.u32 %v281, 7
  %v283 = vsub.s32 7, %v282
  %v284 = vrot.slane %v30, %v283
  %v285 = vmul.f32 %v280, %v46
  %v286 = vmul.f32 %v284, %v46
  %v287 = vsub.f32 %v275, %v285
  %v288 = vsub.f32 %v276, %v286
  %v289 = vmul.f32 %v270, %v46
  %v290 = vmul.f32 %v274, %v46
  %v291 = vmul.f32 %v280, %v38
  %v292 = vmul.f32 %v284, %v38
  %v293 = vadd.f32 %v289, %v291
  %v294 = vadd.f32 %v290, %v292
  %v295 = vadd.f32 %v263, %v287
  %v296 = vadd.f32 %v264, %v288
  %v297 = vadd.f32 %v265, %v293
  %v298 = vadd.f32 %v266, %v294
  %v299 = vld [vmem:[%s4] sm:$0xff]
  %v300 = vld [vmem:[%s4 + $0x8] sm:$0xff]
  %v301 = vadd.f32 %v299, %v295
  %v302 = vadd.f32 %v300, %v296
  %303 = vst [vmem:[%s4] sm:$0xff] %v301
  %304 = vst [vmem:[%s4 + $0x8] sm:$0xff] %v302
  %v305 = vld [vmem:[%s5] sm:$0xff]
  %v306 = vld [vmem:[%s5 + $0x8] sm:$0xff]
  %v307 = vadd.f32 %v305, %v297
  %v308 = vadd.f32 %v306, %v298
  %309 = vst [vmem:[%s5] sm:$0xff] %v307
  %310 = vst [vmem:[%s5 + $0x8] sm:$0xff] %v308
  // Predicated region
  $region22: #{spectral_conv2d.1} parent=0 // pred_check
    _
  $region23: #{spectral_conv2d.1} parent=0 // pred_check_branch
    %312 = sbr.rel (0) target = $region25
  $region24: #{spectral_conv2d.1} parent=0 // pred_region
    _
  $region25: #{spectral_conv2d.1} parent=0 // pred_fallthru
    _
  // Predicated region
  $region26: #{spectral_conv2d.1} parent=0 // pred_check
    _
  $region27: #{spectral_conv2d.1} parent=0 // pred_check_branch
    %314 = sbr.rel (0) target = $region29
  $region28: #{spectral_conv2d.1} parent=0 // pred_region
    _
  $region29: #{spectral_conv2d.1} parent=0 // pred_fallthru
    _
  // Predicated region
  $region30: #{spectral_conv2d.1} parent=0 // pred_check
    _
  $region31: #{spectral_conv2d.1} parent=0 // pred_check_branch
    %316 = sbr.rel (0) target = $region33
  $region32: #{spectral_conv2d.1} parent=0 // pred_region
    _
  $region33: #{spectral_conv2d.1} parent=0 // pred_fallthru
    _
  // Predicated region
  $region34: #{spectral_conv2d.1} parent=0 // pred_check
    _
  $region35: #{spectral_conv2d.1} parent=0 // pred_check_branch
    %318 = sbr.rel (0) target = $region37
  $region36: #{spectral_conv2d.1} parent=0 // pred_region
    _
  $region37: #{spectral_conv2d.1} parent=0 // pred_fallthru
    _

</llo_original>
